<compile_context>
chip_gen: v7x
topology: tpu7x:2x2x1
jax: 0.10.0
libtpu: 0.0.40
codegen_flags: <defaults>
</compile_context>

<pallas_src>
import math
import functools

import jax
import jax.numpy as jnp
from jax.experimental import pallas as pl
from jax.experimental.pallas import tpu as pltpu

_EPS = 1e-8  # matches torch.cosine_similarity default eps


# ----------------------------------------------------------------------------
# Kernels
# ----------------------------------------------------------------------------
def _cos_reduce_sublane_kernel(x_ref, y_ref, out_ref, *acc_refs, d, tk, tn, post,
                               num_k, if_mean, mask_cols):
    """Path A: reduction dim on sublanes, flattened trailing dims on lanes.

    Blocks are (tk, tn).  When num_k > 1 the reduction is accumulated in VMEM
    scratch across the last ("arbitrary") grid axis.
    """
    j = pl.program_id(1)
    k = pl.program_id(2)

    x = x_ref[...].astype(jnp.float32)          # (tk, tn)
    y = y_ref[...].astype(jnp.float32)

    if num_k > 1 and (d % tk) != 0:
        # Mask garbage rows of the partial last reduction block.
        row = k * tk + jax.lax.broadcasted_iota(jnp.int32, x.shape, 0)
        keep = row < d
        x = jnp.where(keep, x, 0.0)
        y = jnp.where(keep, y, 0.0)

    pdot = jnp.sum(x * y, axis=0, keepdims=True)   # (1, tn)
    px2 = jnp.sum(x * x, axis=0, keepdims=True)
    py2 = jnp.sum(y * y, axis=0, keepdims=True)

    if num_k > 1:
        dot_acc, x2_acc, y2_acc = acc_refs

        @pl.when(k == 0)
        def _init():
            dot_acc[...] = jnp.zeros_like(dot_acc)
            x2_acc[...] = jnp.zeros_like(x2_acc)
            y2_acc[...] = jnp.zeros_like(y2_acc)

        dot_acc[...] += pdot
        x2_acc[...] += px2
        y2_acc[...] += py2

    def _finalize():
        if num_k > 1:
            dot = acc_refs[0][...]
            x2 = acc_refs[1][...]
            y2 = acc_refs[2][...]
        else:
            dot, x2, y2 = pdot, px2, py2
        cos = dot * jax.lax.rsqrt(jnp.maximum(x2 * y2, _EPS * _EPS))
        if if_mean:
            if mask_cols:
                col = j * tn + jax.lax.broadcasted_iota(jnp.int32, cos.shape, 1)
                cos = jnp.where(col < post, cos, 0.0)
            out_ref[...] = jnp.broadcast_to(jnp.sum(cos, keepdims=True), (1, 128))
        else:
            # Tail lanes of a partial block are dropped by the masked HBM store.
            out_ref[...] = cos

    pl.when(k == num_k - 1)(_finalize)


def _cos_reduce_lane_kernel(x_ref, y_ref, out_ref, *, pre, tm, if_mean, mask_rows):
    """Path B: `dim` is (effectively) the last axis -> reduce along lanes."""
    i = pl.program_id(0)

    x = x_ref[...].astype(jnp.float32)          # (tm, d)
    y = y_ref[...].astype(jnp.float32)

    dot = jnp.sum(x * y, axis=-1, keepdims=True)   # (tm, 1)
    x2 = jnp.sum(x * x, axis=-1, keepdims=True)
    y2 = jnp.sum(y * y, axis=-1, keepdims=True)
    cos = dot * jax.lax.rsqrt(jnp.maximum(x2 * y2, _EPS * _EPS))

    if if_mean:
        if mask_rows:
            row = i * tm + jax.lax.broadcasted_iota(jnp.int32, cos.shape, 0)
            cos = jnp.where(row < pre, cos, 0.0)
        out_ref[...] = jnp.broadcast_to(jnp.sum(cos, keepdims=True), (1, 128))
    else:
        out_ref[...] = cos                      # tail rows dropped by masked store


# ----------------------------------------------------------------------------
# Planning helpers (all static / trace-time)
# ----------------------------------------------------------------------------
def _round_up(a, b):
    return -(-a // b) * b


def _sublane_pack(itemsize):
    # f32 -> 8, bf16/f16 -> 16, int8/fp8 -> 32 sublanes per vreg.
    return max(8, 32 // max(1, itemsize))


def _vmem_capacity_bytes():
    try:
        return int(pltpu.get_tpu_info().vmem_capacity_bytes)
    except Exception:
        return 64 * 1024 * 1024   # conservative fallback (v7x per-core VMEM)


def _is_multi_tc_chip():
    """True for chips with 2 TensorCores sharing the grid (v7x)."""
    try:
        kind = jax.devices()[0].device_kind.lower()
    except Exception:
        return False
    return ("v7" in kind) or ("7x" in kind)


def _dimension_semantics(num_axes, tile_axis, reduce_last):
    if _is_multi_tc_chip():
        sems = [pltpu.PARALLEL] * num_axes
        if reduce_last:
            sems[-1] = pltpu.ARBITRARY
        # Shard the lane-tile axis across the two TensorCores on v7x.
        sems[tile_axis] = pltpu.CORE_PARALLEL
    else:
        sems = ["parallel"] * num_axes
        if reduce_last:
            sems[-1] = "arbitrary"
    return tuple(sems)


def _plan_sublane_tiles(d, post, itemsize, pack, in_budget, force_tk=None):
    """Pick (tk, tn, num_k, num_j) for path A."""
    post_ceil = _round_up(post, 128)
    overhead = 256  # bytes/lane: f32 out double-buffers + scratch + slack

    def tn_for(tk):
        d_pad = _round_up(tk, pack)
        per_lane = 4 * d_pad * itemsize + overhead   # 2 inputs x 2 pipeline buffers
        tn = (in_budget // per_lane) // 128 * 128
        return int(max(128, min(tn, 32 * 1024, post_ceil)))

    d_pad_full = _round_up(d, pack)
    if force_tk is not None:                       # test hook for the deep path
        tk = min(int(force_tk), d)
        if tk < d:
            tk = min(max(pack, _round_up(tk, pack)), d_pad_full)
        if tk >= d:
            tk = d
    else:
        tk = d
        if tn_for(d) < 512 and d_pad_full > pack:
            # Reduction too deep for a wide lane tile: tile d (last grid axis).
            max_rows = max(pack, (in_budget // 512 - overhead) // (4 * itemsize))
            tk = max(pack, (max_rows // pack) * pack)
            if tk >= d:
                tk = d

    tn = tn_for(tk)
    num_k = pl.cdiv(d, tk)
    num_j = pl.cdiv(post, tn)
    return tk, tn, num_k, num_j


def _plan_lane_tiles(d, pre, itemsize, pack, in_budget):
    """Pick the row tile tm for path B (blocks are (tm, d))."""
    d_lane = _round_up(d, 128)
    per_row = 4 * d_lane * itemsize + 1024   # 2 inputs x 2 buffers + out block
    tm = (in_budget // per_row) // pack * pack
    return int(max(pack, min(tm, 4096, _round_up(pre, pack))))


# ----------------------------------------------------------------------------
# Public entry point
# ----------------------------------------------------------------------------
@functools.partial(jax.jit, static_argnames=("dim", "if_mean", "_force_tk"))
def cosine_loss(x, y, dim=0, if_mean=True, _force_tk=None):
    """Pallas implementation of CosineLoss.forward(x, y, dim, if_mean)."""
    shape = x.shape
    ndim = len(shape)
    dim = dim % ndim
    d = shape[dim]
    pre = int(math.prod(shape[:dim]))
    post = int(math.prod(shape[dim + 1:]))
    rest_shape = shape[:dim] + shape[dim + 1:]
    n_out = pre * post

    itemsize = jnp.dtype(x.dtype).itemsize
    pack = _sublane_pack(itemsize)
    vmem_cap = _vmem_capacity_bytes()
    in_budget = vmem_cap // 4            # double-buffered input working set
    vmem_limit = int(vmem_cap // 2)      # 64 MiB on v5e/v6e, 32 MiB on v7x

    if post > 1:
        # ---- Path A: free row-major view (pre, d, post); reduce on sublanes ----
        x3 = x.reshape(pre, d, post)
        y3 = y.reshape(pre, d, post)

        tk, tn, num_k, num_j = _plan_sublane_tiles(
            d, post, itemsize, pack, in_budget, _force_tk)
        mask_cols = (post % tn) != 0

        kernel = functools.partial(
            _cos_reduce_sublane_kernel,
            d=d, tk=tk, tn=tn, post=post, num_k=num_k,
            if_mean=if_mean, mask_cols=mask_cols)

        in_specs = [
            pl.BlockSpec((None, tk, tn), lambda p, j, k: (p, k, j)),
            pl.BlockSpec((None, tk, tn), lambda p, j, k: (p, k, j)),
        ]
        scratch = ([pltpu.VMEM((1, tn), jnp.float32) for _ in range(3)]
                   if num_k > 1 else [])

        if if_mean:
            out_shape = jax.ShapeDtypeStruct((pre, 1, num_j * 128), jnp.float32)
            out_specs = pl.BlockSpec((None, 1, 128), lambda p, j, k: (p, 0, j))
        else:
            out_shape = jax.ShapeDtypeStruct((pre, 1, post), jnp.float32)
            out_specs = pl.BlockSpec((None, 1, tn), lambda p, j, k: (p, 0, j))

        out = pl.pallas_call(
            kernel,
            out_shape=out_shape,
            grid_spec=pltpu.PrefetchScalarGridSpec(
                num_scalar_prefetch=0,
                grid=(pre, num_j, num_k),
                in_specs=in_specs,
                out_specs=out_specs,
                scratch_shapes=scratch),
            compiler_params=pltpu.CompilerParams(
                dimension_semantics=_dimension_semantics(
                    3, tile_axis=1, reduce_last=(num_k > 1)),
                vmem_limit_bytes=vmem_limit),
        )(x3, y3)

        if if_mean:
            total = jnp.sum(out.reshape(pre, num_j, 128)[:, :, 0])
            return (1.0 - total / n_out).astype(x.dtype)
        cos = out.reshape(rest_shape)
        return (1.0 - cos).astype(x.dtype)

    else:
        # ---- Path B: dim is (effectively) the last axis; reduce on lanes ----
        x2d = x.reshape(pre, d)
        y2d = y.reshape(pre, d)

        tm = _plan_lane_tiles(d, pre, itemsize, pack, in_budget)
        num_i = pl.cdiv(pre, tm)
        mask_rows = (pre % tm) != 0

        kernel = functools.partial(
            _cos_reduce_lane_kernel, pre=pre, tm=tm,
            if_mean=if_mean, mask_rows=mask_rows)

        in_specs = [
            pl.BlockSpec((tm, d), lambda i: (i, 0)),
            pl.BlockSpec((tm, d), lambda i: (i, 0)),
        ]

        if if_mean:
            out_shape = jax.ShapeDtypeStruct((num_i, 1, 128), jnp.float32)
            out_specs = pl.BlockSpec((None, 1, 128), lambda i: (i, 0, 0))
        else:
            out_shape = jax.ShapeDtypeStruct((pre, 1), jnp.float32)
            out_specs = pl.BlockSpec((tm, 1), lambda i: (i, 0))

        out = pl.pallas_call(
            kernel,
            out_shape=out_shape,
            grid_spec=pltpu.PrefetchScalarGridSpec(
                num_scalar_prefetch=0,
                grid=(num_i,),
                in_specs=in_specs,
                out_specs=out_specs),
            compiler_params=pltpu.CompilerParams(
                dimension_semantics=_dimension_semantics(
                    1, tile_axis=0, reduce_last=False),
                vmem_limit_bytes=vmem_limit),
        )(x2d, y2d)

        if if_mean:
            total = jnp.sum(out[:, 0, 0])
            return (1.0 - total / n_out).astype(x.dtype)
        cos = out[:, 0].reshape(rest_shape)
        return (1.0 - cos).astype(x.dtype)


# ----------------------------------------------------------------------------
# Reference + tests
# ----------------------------------------------------------------------------
def _reference(x, y, dim=0, if_mean=True):
    dot = jnp.sum(x * y, axis=dim)
    x2 = jnp.sum(x * x, axis=dim)
    y2 = jnp.sum(y * y, axis=dim)
    cos = dot / jnp.sqrt(jnp.maximum(x2 * y2, _EPS * _EPS))
    return 1.0 - cos.mean() if if_mean else 1.0 - cos


def _check(out, ref, tag):
    assert jnp.allclose(out, ref, atol=1e-5, rtol=1e-5), (tag, out, ref)


if __name__ == "__main__":
    key = jax.random.PRNGKey(0)
    kx, ky = jax.random.split(key)

    # 1) NCHW, dim=0 (default), mean + map.
    x = jax.random.normal(kx, (2, 4, 16, 16), dtype=jnp.float32)
    y = jax.random.normal(ky, (2, 4, 16, 16), dtype=jnp.float32)
    out = cosine_loss(x, y, dim=0, if_mean=True)
    jax.block_until_ready(out)
    _check(out, _reference(x, y, 0, True), "dim0_mean")
    out = cosine_loss(x, y, dim=0, if_mean=False)
    jax.block_until_ready(out)
    _check(out, _reference(x, y, 0, False), "dim0_map")

    # 2) dim=1 with odd spatial sizes (pre>1, lane-tail masking), mean + map.
    xi = jax.random.normal(kx, (2, 5, 9, 9), dtype=jnp.float32)
    yi = jax.random.normal(ky, (2, 5, 9, 9), dtype=jnp.float32)
    out = cosine_loss(xi, yi, dim=1, if_mean=True)
    jax.block_until_ready(out)
    _check(out, _reference(xi, yi, 1, True), "dim1_mean")
    out = cosine_loss(xi, yi, dim=1, if_mean=False)
    jax.block_until_ready(out)
    _check(out, _reference(xi, yi, 1, False), "dim1_map")

    # 3) dim = last axis (lane-reduction path), mean + map.
    xl = jax.random.normal(kx, (2, 8, 32), dtype=jnp.float32)
    yl = jax.random.normal(ky, (2, 8, 32), dtype=jnp.float32)
    out = cosine_loss(xl, yl, dim=2, if_mean=True)
    jax.block_until_ready(out)
    _check(out, _reference(xl, yl, 2, True), "lastdim_mean")
    out = cosine_loss(xl, yl, dim=2, if_mean=False)
    jax.block_until_ready(out)
    _check(out, _reference(xl, yl, 2, False), "lastdim_map")

    # 4) Deep-reduction accumulator path (forced reduction tiling), mean + map.
    xd = jax.random.normal(kx, (2, 20, 160), dtype=jnp.float32)
    yd = jax.random.normal(ky, (2, 20, 160), dtype=jnp.float32)
    out = cosine_loss(xd, yd, dim=1, if_mean=True, _force_tk=8)
    jax.block_until_ready(out)
    _check(out, _reference(xd, yd, 1, True), "ktiled_mean")
    out = cosine_loss(xd, yd, dim=1, if_mean=False, _force_tk=8)
    jax.block_until_ready(out)
    _check(out, _reference(xd, yd, 1, False), "ktiled_map")

    print("KERNEL_OK")
</pallas_src>

<mosaic_0001>
module attributes {stable_mosaic.version = 11 : i64} {
  func.func @_cos_reduce_sublane_kernel(%arg0: i32, %arg1: i32, %arg2: i32, %arg3: memref<1x2x1024xf32, #tpu.memory_space<vmem>>, %arg4: memref<1x2x1024xf32, #tpu.memory_space<vmem>>, %arg5: memref<1x1x128xf32, #tpu.memory_space<vmem>>) attributes {dimension_semantics = [#tpu.dimension_semantics<parallel>, #tpu.dimension_semantics<parallel>, #tpu.dimension_semantics<parallel>], iteration_bounds = array<i64: 1, 1, 1>, scalar_prefetch = 0 : i64, scratch_operands = 0 : i64, tpu.core_type = #tpu.core_type<tc>, window_params = [{transform_indices = @transform_0, window_bounds = array<i64: 1, 2, 1024>}, {transform_indices = @transform_1, window_bounds = array<i64: 1, 2, 1024>}, {transform_indices = @transform_2, window_bounds = array<i64: 1, 1, 128>}]} {
    %c0 = arith.constant 0 : index
    %c0_0 = arith.constant 0 : index
    %c0_1 = arith.constant 0 : index
    %0 = vector.load %arg3[%c0, %c0_0, %c0_1] : memref<1x2x1024xf32, #tpu.memory_space<vmem>>, vector<1x2x1024xf32>
    %1 = vector.shape_cast %0 : vector<1x2x1024xf32> to vector<2x1024xf32>
    %c0_2 = arith.constant 0 : index
    %c0_3 = arith.constant 0 : index
    %c0_4 = arith.constant 0 : index
    %2 = vector.load %arg4[%c0_2, %c0_3, %c0_4] : memref<1x2x1024xf32, #tpu.memory_space<vmem>>, vector<1x2x1024xf32>
    %3 = vector.shape_cast %2 : vector<1x2x1024xf32> to vector<2x1024xf32>
    %4 = arith.mulf %1, %3 : vector<2x1024xf32>
    %cst = arith.constant dense<0.000000e+00> : vector<1024xf32>
    %5 = vector.multi_reduction <add>, %4, %cst [0] : vector<2x1024xf32> to vector<1024xf32>
    %6 = vector.shape_cast %5 : vector<1024xf32> to vector<1x1024xf32>
    %7 = arith.mulf %1, %1 : vector<2x1024xf32>
    %cst_5 = arith.constant dense<0.000000e+00> : vector<1024xf32>
    %8 = vector.multi_reduction <add>, %7, %cst_5 [0] : vector<2x1024xf32> to vector<1024xf32>
    %9 = vector.shape_cast %8 : vector<1024xf32> to vector<1x1024xf32>
    %10 = arith.mulf %3, %3 : vector<2x1024xf32>
    %cst_6 = arith.constant dense<0.000000e+00> : vector<1024xf32>
    %11 = vector.multi_reduction <add>, %10, %cst_6 [0] : vector<2x1024xf32> to vector<1024xf32>
    %12 = vector.shape_cast %11 : vector<1024xf32> to vector<1x1024xf32>
    %c0_i32 = arith.constant 0 : i32
    %13 = arith.cmpi eq, %arg2, %c0_i32 : i32
    %14 = arith.extui %13 : i1 to i32
    %c0_i32_7 = arith.constant 0 : i32
    %15 = arith.cmpi ne, %14, %c0_i32_7 : i32
    scf.if %15 {
      %16 = arith.mulf %9, %12 : vector<1x1024xf32>
      %cst_8 = arith.constant 1.000000e-16 : f32
      %17 = vector.broadcast %cst_8 : f32 to vector<1x1024xf32>
      %18 = arith.maximumf %16, %17 : vector<1x1024xf32>
      %19 = math.rsqrt %18 : vector<1x1024xf32>
      %20 = arith.mulf %6, %19 : vector<1x1024xf32>
      %21 = vector.shape_cast %20 : vector<1x1024xf32> to vector<1x1x1024xf32>
      %cst_9 = arith.constant dense<0.000000e+00> : vector<1xf32>
      %22 = vector.multi_reduction <add>, %21, %cst_9 [1, 2] : vector<1x1x1024xf32> to vector<1xf32>
      %23 = vector.shape_cast %22 : vector<1xf32> to vector<1x1x1xf32>
      %24 = vector.extract %23[0, 0, 0] : f32 from vector<1x1x1xf32>
      %25 = vector.broadcast %24 : f32 to vector<1x1xf32>
      %26 = vector.shape_cast %25 : vector<1x1xf32> to vector<1x1xf32>
      %27 = vector.broadcast %26 : vector<1x1xf32> to vector<1x128xf32>
      %c0_10 = arith.constant 0 : index
      %c0_11 = arith.constant 0 : index
      %c0_12 = arith.constant 0 : index
      %28 = vector.load %arg5[%c0_10, %c0_11, %c0_12] : memref<1x1x128xf32, #tpu.memory_space<vmem>>, vector<1x1x128xf32>
      %29 = vector.shape_cast %28 : vector<1x1x128xf32> to vector<1x128xf32>
      %30 = vector.shape_cast %27 : vector<1x128xf32> to vector<1x1x128xf32>
      tpu.vector_store %arg5[%c0_10, %c0_11, %c0_12], %30 {strides = array<i32>} : memref<1x1x128xf32, #tpu.memory_space<vmem>>, vector<1x1x128xf32>,
    } else {
    }
    return
  }
  func.func @transform_0(%arg0: i32, %arg1: i32, %arg2: i32) -> (i32, i32, i32) {
    %c0_i32 = arith.constant 0 : i32
    return %arg0, %arg2, %arg1 : i32, i32, i32
  }
  func.func @transform_1(%arg0: i32, %arg1: i32, %arg2: i32) -> (i32, i32, i32) {
    %c0_i32 = arith.constant 0 : i32
    return %arg0, %arg2, %arg1 : i32, i32, i32
  }
  func.func @transform_2(%arg0: i32, %arg1: i32, %arg2: i32) -> (i32, i32, i32) {
    %c0_i32 = arith.constant 0 : i32
    %c0_i32_0 = arith.constant 0 : i32
    return %arg0, %c0_i32, %arg1 : i32, i32, i32
  }
}

</mosaic_0001>

<llo_original>
// kernel: cosine_loss.1
$region0: #{cosine_loss.1}
  #allocation0 [shape = 'u32[]', space=smem, size = 0x4, offset = 0x4, fixed_abs, tag = 'smem constant byte address 0x4 - core index']
  #allocation1 [shape = 'u32[144,128]{1,0:T(1,128)}', space=vmem, size = 0x12000, scoped, tag = 'internal scratch']
  %s0 = inlined_call_operand.vmem [shape: f32[1,2,1024], index: 0, kind: input, shape index: {}]
  %s1 = inlined_call_operand.vmem [shape: f32[1,2,1024], index: 1, kind: input, shape index: {}]
  %s2 = inlined_call_operand.vmem [shape: f32[1,1,128], index: 2, kind: output, shape index: {}]
  %s3 = sld [smem:[#allocation0]]
  $region22: #{cosine_loss.1} parent=0
    _
  %s5 = ssub.s32 1, %s3
  %s6 = scalar_select 0, %s5, %s3
  // Predicated region
  $region2: #{cosine_loss.1} parent=0 // pred_check
    _
  $region3: #{cosine_loss.1} parent=0 // pred_check_branch
    %8 = sbr.rel (0) target = $region5
  $region4: #{cosine_loss.1} parent=0 // pred_region
    _
  $region5: #{cosine_loss.1} parent=0 // pred_fallthru
    _
  // Predicated region
  $region6: #{cosine_loss.1} parent=0 // pred_check
    _
  $region7: #{cosine_loss.1} parent=0 // pred_check_branch
    %10 = sbr.rel (0) target = $region9
  $region8: #{cosine_loss.1} parent=0 // pred_region
    _
  $region9: #{cosine_loss.1} parent=0 // pred_fallthru
    _
  %v11 = vld [vmem:[%s0] sm:$0xff]
  %v12 = vld [vmem:[%s0 + $0x8] sm:$0xff]
  %v13 = vld [vmem:[%s1] sm:$0xff]
  %v14 = vld [vmem:[%s1 + $0x8] sm:$0xff]
  %v15 = vmul.f32 %v11, %v13
  %v16 = vmul.f32 %v12, %v14
  %v19 = vcombine.high %v15, %v15
  %v21 = vunpack.c.l.s4 1983009808
  %v22 = vunpack.c.0.s8 %v21
  %v23 = vlaneseq
  %v24 = vshrl.u32 %v23, 7
  %v25 = vsub.s32 %v22, %v24
  %v26 = vrot.slane %v15, %v25
  %v28 = vunpack.c.l.s4 1983009808
  %v29 = vunpack.c.0.s8 %v28
  %v30 = vlaneseq
  %v31 = vshrl.u32 %v30, 7
  %v32 = vsub.s32 %v29, %v31
  %v33 = vrot.slane %v19, %v32
  %v34 = vcombine.high %v26, %v26
  %v35 = vcombine.high %v33, %v33
  %v36 = vcombine.high %v16, %v16
  %v38 = vunpack.c.l.s4 1983009808
  %v39 = vunpack.c.0.s8 %v38
  %v40 = vlaneseq
  %v41 = vshrl.u32 %v40, 7
  %v42 = vsub.s32 %v39, %v41
  %v43 = vrot.slane %v16, %v42
  %v45 = vunpack.c.l.s4 1983009808
  %v46 = vunpack.c.0.s8 %v45
  %v47 = vlaneseq
  %v48 = vshrl.u32 %v47, 7
  %v49 = vsub.s32 %v46, %v48
  %v50 = vrot.slane %v36, %v49
  %v51 = vcombine.high %v43, %v43
  %v52 = vcombine.high %v50, %v50
  %vm61 = vcmask 1041408
  %v62 = vsel %vm61, %v26, 0.0
  %v63 = vrot.slane %v62, 4
  %v64 = vadd.f32 %v62, %v63
  %v65 = vrot.slane %v64, 2
  %v66 = vadd.f32 %v64, %v65
  %v67 = vrot.slane %v66, 1
  %v68 = vadd.f32 %v66, %v67
  %v69 = vsel %vm61, %v34, 0.0
  %v70 = vrot.slane %v69, 4
  %v71 = vadd.f32 %v69, %v70
  %v72 = vrot.slane %v71, 2
  %v73 = vadd.f32 %v71, %v72
  %v74 = vrot.slane %v73, 1
  %v75 = vadd.f32 %v73, %v74
  %v76 = vsel %vm61, %v33, 0.0
  %v77 = vrot.slane %v76, 4
  %v78 = vadd.f32 %v76, %v77
  %v79 = vrot.slane %v78, 2
  %v80 = vadd.f32 %v78, %v79
  %v81 = vrot.slane %v80, 1
  %v82 = vadd.f32 %v80, %v81
  %v83 = vsel %vm61, %v35, 0.0
  %v84 = vrot.slane %v83, 4
  %v85 = vadd.f32 %v83, %v84
  %v86 = vrot.slane %v85, 2
  %v87 = vadd.f32 %v85, %v86
  %v88 = vrot.slane %v87, 1
  %v89 = vadd.f32 %v87, %v88
  %v90 = vsel %vm61, %v43, 0.0
  %v91 = vrot.slane %v90, 4
  %v92 = vadd.f32 %v90, %v91
  %v93 = vrot.slane %v92, 2
  %v94 = vadd.f32 %v92, %v93
  %v95 = vrot.slane %v94, 1
  %v96 = vadd.f32 %v94, %v95
  %v97 = vsel %vm61, %v51, 0.0
  %v98 = vrot.slane %v97, 4
  %v99 = vadd.f32 %v97, %v98
  %v100 = vrot.slane %v99, 2
  %v101 = vadd.f32 %v99, %v100
  %v102 = vrot.slane %v101, 1
  %v103 = vadd.f32 %v101, %v102
  %v104 = vsel %vm61, %v50, 0.0
  %v105 = vrot.slane %v104, 4
  %v106 = vadd.f32 %v104, %v105
  %v107 = vrot.slane %v106, 2
  %v108 = vadd.f32 %v106, %v107
  %v109 = vrot.slane %v108, 1
  %v110 = vadd.f32 %v108, %v109
  %v111 = vsel %vm61, %v52, 0.0
  %v112 = vrot.slane %v111, 4
  %v113 = vadd.f32 %v111, %v112
  %v114 = vrot.slane %v113, 2
  %v115 = vadd.f32 %v113, %v114
  %v116 = vrot.slane %v115, 1
  %v117 = vadd.f32 %v115, %v116
  %v118 = vmul.f32 %v11, %v11
  %v119 = vmul.f32 %v12, %v12
  %v122 = vcombine.high %v118, %v118
  %v124 = vunpack.c.l.s4 1983009808
  %v125 = vunpack.c.0.s8 %v124
  %v126 = vlaneseq
  %v127 = vshrl.u32 %v126, 7
  %v128 = vsub.s32 %v125, %v127
  %v129 = vrot.slane %v118, %v128
  %v131 = vunpack.c.l.s4 1983009808
  %v132 = vunpack.c.0.s8 %v131
  %v133 = vlaneseq
  %v134 = vshrl.u32 %v133, 7
  %v135 = vsub.s32 %v132, %v134
  %v136 = vrot.slane %v122, %v135
  %v137 = vcombine.high %v129, %v129
  %v138 = vcombine.high %v136, %v136
  %v139 = vcombine.high %v119, %v119
  %v141 = vunpack.c.l.s4 1983009808
  %v142 = vunpack.c.0.s8 %v141
  %v143 = vlaneseq
  %v144 = vshrl.u32 %v143, 7
  %v145 = vsub.s32 %v142, %v144
  %v146 = vrot.slane %v119, %v145
  %v148 = vunpack.c.l.s4 1983009808
  %v149 = vunpack.c.0.s8 %v148
  %v150 = vlaneseq
  %v151 = vshrl.u32 %v150, 7
  %v152 = vsub.s32 %v149, %v151
  %v153 = vrot.slane %v139, %v152
  %v154 = vcombine.high %v146, %v146
  %v155 = vcombine.high %v153, %v153
  %v164 = vsel %vm61, %v129, 0.0
  %v165 = vrot.slane %v164, 4
  %v166 = vadd.f32 %v164, %v165
  %v167 = vrot.slane %v166, 2
  %v168 = vadd.f32 %v166, %v167
  %v169 = vrot.slane %v168, 1
  %v170 = vadd.f32 %v168, %v169
  %v171 = vsel %vm61, %v137, 0.0
  %v172 = vrot.slane %v171, 4
  %v173 = vadd.f32 %v171, %v172
  %v174 = vrot.slane %v173, 2
  %v175 = vadd.f32 %v173, %v174
  %v176 = vrot.slane %v175, 1
  %v177 = vadd.f32 %v175, %v176
  %v178 = vsel %vm61, %v136, 0.0
  %v179 = vrot.slane %v178, 4
  %v180 = vadd.f32 %v178, %v179
  %v181 = vrot.slane %v180, 2
  %v182 = vadd.f32 %v180, %v181
  %v183 = vrot.slane %v182, 1
  %v184 = vadd.f32 %v182, %v183
  %v185 = vsel %vm61, %v138, 0.0
  %v186 = vrot.slane %v185, 4
  %v187 = vadd.f32 %v185, %v186
  %v188 = vrot.slane %v187, 2
  %v189 = vadd.f32 %v187, %v188
  %v190 = vrot.slane %v189, 1
  %v191 = vadd.f32 %v189, %v190
  %v192 = vsel %vm61, %v146, 0.0
  %v193 = vrot.slane %v192, 4
  %v194 = vadd.f32 %v192, %v193
  %v195 = vrot.slane %v194, 2
  %v196 = vadd.f32 %v194, %v195
  %v197 = vrot.slane %v196, 1
  %v198 = vadd.f32 %v196, %v197
  %v199 = vsel %vm61, %v154, 0.0
  %v200 = vrot.slane %v199, 4
  %v201 = vadd.f32 %v199, %v200
  %v202 = vrot.slane %v201, 2
  %v203 = vadd.f32 %v201, %v202
  %v204 = vrot.slane %v203, 1
  %v205 = vadd.f32 %v203, %v204
  %v206 = vsel %vm61, %v153, 0.0
  %v207 = vrot.slane %v206, 4
  %v208 = vadd.f32 %v206, %v207
  %v209 = vrot.slane %v208, 2
  %v210 = vadd.f32 %v208, %v209
  %v211 = vrot.slane %v210, 1
  %v212 = vadd.f32 %v210, %v211
  %v213 = vsel %vm61, %v155, 0.0
  %v214 = vrot.slane %v213, 4
  %v215 = vadd.f32 %v213, %v214
  %v216 = vrot.slane %v215, 2
  %v217 = vadd.f32 %v215, %v216
  %v218 = vrot.slane %v217, 1
  %v219 = vadd.f32 %v217, %v218
  %v220 = vmul.f32 %v13, %v13
  %v221 = vmul.f32 %v14, %v14
  %v224 = vcombine.high %v220, %v220
  %v226 = vunpack.c.l.s4 1983009808
  %v227 = vunpack.c.0.s8 %v226
  %v228 = vlaneseq
  %v229 = vshrl.u32 %v228, 7
  %v230 = vsub.s32 %v227, %v229
  %v231 = vrot.slane %v220, %v230
  %v233 = vunpack.c.l.s4 1983009808
  %v234 = vunpack.c.0.s8 %v233
  %v235 = vlaneseq
  %v236 = vshrl.u32 %v235, 7
  %v237 = vsub.s32 %v234, %v236
  %v238 = vrot.slane %v224, %v237
  %v239 = vcombine.high %v231, %v231
  %v240 = vcombine.high %v238, %v238
  %v241 = vcombine.high %v221, %v221
  %v243 = vunpack.c.l.s4 1983009808
  %v244 = vunpack.c.0.s8 %v243
  %v245 = vlaneseq
  %v246 = vshrl.u32 %v245, 7
  %v247 = vsub.s32 %v244, %v246
  %v248 = vrot.slane %v221, %v247
  %v250 = vunpack.c.l.s4 1983009808
  %v251 = vunpack.c.0.s8 %v250
  %v252 = vlaneseq
  %v253 = vshrl.u32 %v252, 7
  %v254 = vsub.s32 %v251, %v253
  %v255 = vrot.slane %v241, %v254
  %v256 = vcombine.high %v248, %v248
  %v257 = vcombine.high %v255, %v255
  %v266 = vsel %vm61, %v231, 0.0
  %v267 = vrot.slane %v266, 4
  %v268 = vadd.f32 %v266, %v267
  %v269 = vrot.slane %v268, 2
  %v270 = vadd.f32 %v268, %v269
  %v271 = vrot.slane %v270, 1
  %v272 = vadd.f32 %v270, %v271
  %v273 = vsel %vm61, %v239, 0.0
  %v274 = vrot.slane %v273, 4
  %v275 = vadd.f32 %v273, %v274
  %v276 = vrot.slane %v275, 2
  %v277 = vadd.f32 %v275, %v276
  %v278 = vrot.slane %v277, 1
  %v279 = vadd.f32 %v277, %v278
  %v280 = vsel %vm61, %v238, 0.0
  %v281 = vrot.slane %v280, 4
  %v282 = vadd.f32 %v280, %v281
  %v283 = vrot.slane %v282, 2
  %v284 = vadd.f32 %v282, %v283
  %v285 = vrot.slane %v284, 1
  %v286 = vadd.f32 %v284, %v285
  %v287 = vsel %vm61, %v240, 0.0
  %v288 = vrot.slane %v287, 4
  %v289 = vadd.f32 %v287, %v288
  %v290 = vrot.slane %v289, 2
  %v291 = vadd.f32 %v289, %v290
  %v292 = vrot.slane %v291, 1
  %v293 = vadd.f32 %v291, %v292
  %v294 = vsel %vm61, %v248, 0.0
  %v295 = vrot.slane %v294, 4
  %v296 = vadd.f32 %v294, %v295
  %v297 = vrot.slane %v296, 2
  %v298 = vadd.f32 %v296, %v297
  %v299 = vrot.slane %v298, 1
  %v300 = vadd.f32 %v298, %v299
  %v301 = vsel %vm61, %v256, 0.0
  %v302 = vrot.slane %v301, 4
  %v303 = vadd.f32 %v301, %v302
  %v304 = vrot.slane %v303, 2
  %v305 = vadd.f32 %v303, %v304
  %v306 = vrot.slane %v305, 1
  %v307 = vadd.f32 %v305, %v306
  %v308 = vsel %vm61, %v255, 0.0
  %v309 = vrot.slane %v308, 4
  %v310 = vadd.f32 %v308, %v309
  %v311 = vrot.slane %v310, 2
  %v312 = vadd.f32 %v310, %v311
  %v313 = vrot.slane %v312, 1
  %v314 = vadd.f32 %v312, %v313
  %v315 = vsel %vm61, %v257, 0.0
  %v316 = vrot.slane %v315, 4
  %v317 = vadd.f32 %v315, %v316
  %v318 = vrot.slane %v317, 2
  %v319 = vadd.f32 %v317, %v318
  %v320 = vrot.slane %v319, 1
  %v321 = vadd.f32 %v319, %v320
  %p322 = scmp.eq.s32.totalorder 0, 0
  // Predicated region
  $region10: #{cosine_loss.1} parent=0 // pred_check
    %p323 = pneg %p322
  $region11: #{cosine_loss.1} parent=0 // pred_check_branch
    %325 = sbr.rel (%p323) target = $region13
  $region12: #{cosine_loss.1} parent=0 // pred_region
    %v326 = vmul.f32 %v170, %v272
    %v327 = vmul.f32 %v177, %v279
    %v328 = vmul.f32 %v184, %v286
    %v329 = vmul.f32 %v191, %v293
    %v330 = vmul.f32 %v198, %v300
    %v331 = vmul.f32 %v205, %v307
    %v332 = vmul.f32 %v212, %v314
    %v333 = vmul.f32 %v219, %v321
    %v334 = vmax.f32 %v326, 1e-16
    %v335 = vmax.f32 %v327, 1e-16
    %v336 = vmax.f32 %v328, 1e-16
    %v337 = vmax.f32 %v329, 1e-16
    %v338 = vmax.f32 %v330, 1e-16
    %v339 = vmax.f32 %v331, 1e-16
    %v340 = vmax.f32 %v332, 1e-16
    %v341 = vmax.f32 %v333, 1e-16
    %v342 = vrsqrt.pop %v334
    %v343 = vrsqrt.pop %v335
    %v344 = vrsqrt.pop %v336
    %v345 = vrsqrt.pop %v337
    %v346 = vrsqrt.pop %v338
    %v347 = vrsqrt.pop %v339
    %v348 = vrsqrt.pop %v340
    %v349 = vrsqrt.pop %v341
    %v350 = vmul.f32 %v68, %v342
    %v351 = vmul.f32 %v75, %v343
    %v352 = vmul.f32 %v82, %v344
    %v353 = vmul.f32 %v89, %v345
    %v354 = vmul.f32 %v96, %v346
    %v355 = vmul.f32 %v103, %v347
    %v356 = vmul.f32 %v110, %v348
    %v357 = vmul.f32 %v117, %v349
    %vm358 = vcmask 1040384
    %v359 = vsel %vm358, %v350, 0.0
    %v360 = vsel %vm358, %v351, 0.0
    %v361 = vadd.f32 %v359, %v360
    %v362 = vsel %vm358, %v352, 0.0
    %v363 = vadd.f32 %v361, %v362
    %v364 = vsel %vm358, %v353, 0.0
    %v365 = vadd.f32 %v363, %v364
    %v366 = vsel %vm358, %v354, 0.0
    %v367 = vadd.f32 %v365, %v366
    %v368 = vsel %vm358, %v355, 0.0
    %v369 = vadd.f32 %v367, %v368
    %v370 = vsel %vm358, %v356, 0.0
    %v371 = vadd.f32 %v369, %v370
    %v372 = vsel %vm358, %v357, 0.0
    %v373 = vadd.f32 %v371, %v372
    %374 = vadd.xlane.f32.xlu0 %v373
    %v375 = vpop.xlane.xlu0 %374
    %v376 = vrot.slane %v375, 4
    %v377 = vadd.f32 %v375, %v376
    %v378 = vrot.slane %v377, 2
    %v379 = vadd.f32 %v377, %v378
    %v380 = vrot.slane %v379, 1
    %v381 = vadd.f32 %v379, %v380
    %s382 = vtos %v381
    %v383 = vstv %s382
    %384 = vst [vmem:[%s2] sm:$0x1] %v383
  $region13: #{cosine_loss.1} parent=0 // pred_fallthru
    _
  // Predicated region
  $region14: #{cosine_loss.1} parent=0 // pred_check
    _
  $region15: #{cosine_loss.1} parent=0 // pred_check_branch
    %386 = sbr.rel (0) target = $region17
  $region16: #{cosine_loss.1} parent=0 // pred_region
    _
  $region17: #{cosine_loss.1} parent=0 // pred_fallthru
    _
  // Predicated region
  $region18: #{cosine_loss.1} parent=0 // pred_check
    _
  $region19: #{cosine_loss.1} parent=0 // pred_check_branch
    %388 = sbr.rel (0) target = $region21
  $region20: #{cosine_loss.1} parent=0 // pred_region
    _
  $region21: #{cosine_loss.1} parent=0 // pred_fallthru
    _

</llo_original>
